<compile_context>
chip_gen: v7x
topology: tpu7x:2x2x1
jax: 0.10.0
libtpu: 0.0.40
codegen_flags: <defaults>
</compile_context>

<pallas_src>
import jax
import jax.numpy as jnp
from jax.experimental import pallas as pl
from jax.experimental.pallas import tpu as pltpu


def _neg_log_kernel(x_ref, o_ref):
    # Elementwise hot path: y = -log(x).  log lowers to the EUP.
    x = x_ref[...]
    y = -jnp.log(x.astype(jnp.float32))
    o_ref[...] = y.astype(o_ref.dtype)


def _neg_log_2d(x2d: jax.Array) -> jax.Array:
    """Run the -log kernel on a lane-dense (rows, lane) slab."""
    rows, lane = x2d.shape
    dtype = x2d.dtype
    itemsize = jnp.dtype(dtype).itemsize
    # dtype-dependent sublane granularity: 8 (f32), 16 (bf16), 32 (int8/fp8)
    sub = max(8, 32 // itemsize)

    # ~4 MiB blocks: big enough to hide per-step overhead, small enough that
    # double-buffered in+out (~16 MiB) fits the 32 MiB scoped VMEM on every gen.
    target_block_bytes = 4 * 1024 * 1024
    block_rows = (target_block_bytes // (lane * itemsize)) // sub * sub
    block_rows = max(block_rows, sub)
    if block_rows >= rows:
        block_rows = rows  # single full-extent block (always a legal tiling)
    grid = (pl.cdiv(rows, block_rows),)  # ragged last block handled by Pallas

    return pl.pallas_call(
        _neg_log_kernel,
        out_shape=jax.ShapeDtypeStruct((rows, lane), dtype),
        grid_spec=pltpu.PrefetchScalarGridSpec(
            num_scalar_prefetch=0,
            grid=grid,
            in_specs=[pl.BlockSpec((block_rows, lane), lambda i: (i, 0))],
            out_specs=pl.BlockSpec((block_rows, lane), lambda i: (i, 0)),
        ),
        compiler_params=pltpu.CompilerParams(
            # "parallel" lets the grid axis be sharded across TensorCores on
            # multi-TC parts; harmless on single-TC chips.
            dimension_semantics=("parallel",),
            vmem_limit_bytes=32 * 1024 * 1024,
        ),
        cost_estimate=pl.CostEstimate(
            flops=rows * lane,
            transcendentals=rows * lane,
            bytes_accessed=2 * rows * lane * itemsize,
        ),
    )(x2d)


_WIDTHS = (4096, 2048, 1024, 512, 256, 128)


def surprise(inputs: jax.Array) -> jax.Array:
    """Pallas equivalent of Surprise.forward: -log(inputs), same shape/dtype."""
    orig_shape = inputs.shape
    flat = inputs.reshape(-1)
    n = flat.shape[0]

    if n < 128:
        # Too small for even one lane-dense tile; kernel launch is pure overhead.
        return -jnp.log(inputs)

    # Common case: pick the widest lane width that divides n exactly, so the
    # whole array goes through the kernel with no pad / slice / concat.
    for w in _WIDTHS:
        if n % w == 0:
            return _neg_log_2d(flat.reshape(n // w, w)).reshape(orig_shape)

    # Not 128-aligned: kernel on the aligned bulk, plain jnp on the tiny tail.
    lane = 128
    for w in _WIDTHS:
        if n >= w:
            lane = w
            break
    n_main = (n // lane) * lane
    main = _neg_log_2d(flat[:n_main].reshape(n_main // lane, lane)).reshape(-1)
    tail = -jnp.log(flat[n_main:])
    return jnp.concatenate([main, tail]).reshape(orig_shape)


if __name__ == "__main__":
    key = jax.random.PRNGKey(0)
    # Small NCHW-style input, strictly positive so log is well-defined
    # (matches typical probability inputs to a "surprise" loss).
    x = jax.random.uniform(
        key, (2, 4, 16, 16), dtype=jnp.float32, minval=1e-3, maxval=1.0
    )

    y = jax.block_until_ready(surprise(x))

    ref = -jnp.log(x)
    assert y.shape == x.shape and y.dtype == x.dtype
    assert jnp.allclose(y, ref, rtol=1e-6, atol=1e-6)

    # Also exercise the non-128-aligned path (kernel bulk + jnp tail).
    x2 = jax.random.uniform(
        jax.random.PRNGKey(1), (3, 5, 7, 11), dtype=jnp.float32,
        minval=1e-3, maxval=1.0,
    )
    y2 = jax.block_until_ready(surprise(x2))
    assert y2.shape == x2.shape and y2.dtype == x2.dtype
    assert jnp.allclose(y2, -jnp.log(x2), rtol=1e-6, atol=1e-6)

    print("KERNEL_OK")
</pallas_src>

<mosaic_0001>
module attributes {stable_mosaic.version = 11 : i64} {
  func.func @_neg_log_kernel(%arg0: i32, %arg1: memref<1x2048xf32, #tpu.memory_space<vmem>>, %arg2: memref<1x2048xf32, #tpu.memory_space<vmem>>) attributes {dimension_semantics = [#tpu.dimension_semantics<parallel>], iteration_bounds = array<i64: 1>, scalar_prefetch = 0 : i64, scratch_operands = 0 : i64, tpu.core_type = #tpu.core_type<tc>, window_params = [{transform_indices = @transform_0, window_bounds = array<i64: 1, 2048>}, {transform_indices = @transform_1, window_bounds = array<i64: 1, 2048>}]} {
    %c0 = arith.constant 0 : index
    %c0_0 = arith.constant 0 : index
    %0 = vector.load %arg1[%c0, %c0_0] : memref<1x2048xf32, #tpu.memory_space<vmem>>, vector<1x2048xf32>
    %1 = math.log %0 : vector<1x2048xf32>
    %cst = arith.constant 0.000000e+00 : f32
    %2 = vector.broadcast %cst : f32 to vector<1x2048xf32>
    %3 = arith.subf %2, %1 : vector<1x2048xf32>
    %c0_1 = arith.constant 0 : index
    %c0_2 = arith.constant 0 : index
    %4 = vector.load %arg2[%c0_1, %c0_2] : memref<1x2048xf32, #tpu.memory_space<vmem>>, vector<1x2048xf32>
    tpu.vector_store %arg2[%c0_1, %c0_2], %3 {strides = array<i32>} : memref<1x2048xf32, #tpu.memory_space<vmem>>, vector<1x2048xf32>,
    return
  }
  func.func @transform_0(%arg0: i32) -> (i32, i32) {
    %c0_i32 = arith.constant 0 : i32
    %c0_i32_0 = arith.constant 0 : i32
    return %arg0, %c0_i32 : i32, i32
  }
  func.func @transform_1(%arg0: i32) -> (i32, i32) {
    %c0_i32 = arith.constant 0 : i32
    %c0_i32_0 = arith.constant 0 : i32
    return %arg0, %c0_i32 : i32, i32
  }
}

</mosaic_0001>

<llo_original>
// kernel: tpu_custom_call.1
$region0: #{tpu_custom_call.1}
  #allocation0 [shape = 'u32[]', space=smem, size = 0x4, offset = 0x4, fixed_abs, tag = 'smem constant byte address 0x4 - core index']
  #allocation1 [shape = 'u32[144,128]{1,0:T(1,128)}', space=vmem, size = 0x12000, scoped, tag = 'internal scratch']
  %s0 = inlined_call_operand.hbm [shape: f32[1,2048], index: 0, kind: input, shape index: {}]
  %s1 = inlined_call_operand.hbm [shape: f32[1,2048], index: 1, kind: output, shape index: {}]
  %s2 = sld [smem:[#allocation0]]
  $region18: #{tpu_custom_call.1} parent=0
    _
  %s4 = ssub.s32 1, %s2
  %s5 = scalar_select 0, %s4, %s2
  $region1: #{tpu_custom_call.1} parent=0
    #allocation2 [shape = 'u8[8192]{0}', space=vmem, size = 0x2000, scoped, tag = 'input window, operand 0, single buffered']
    #allocation3 [shape = 's32[1]{0}', space=sflag, size = 0x4, scoped, tag = 'scoped memory for tpu_custom_call.1']
    #allocation4 [shape = 's32[1]{0}', space=sflag, size = 0x4, scoped, tag = 'scoped memory for tpu_custom_call.1']
    #allocation5 [shape = 'u8[8192]{0}', space=vmem, size = 0x2000, scoped, tag = 'output window, operand 0, single buffered']
    %6 = vsyncpa [#allocation3], 0
    %7 = vsyncpa [#allocation4], 0
    // Predicated region
    $region2: #{tpu_custom_call.1} parent=1 // pred_check
      _
    $region3: #{tpu_custom_call.1} parent=1 // pred_check_branch
      %9 = sbr.rel (0) target = $region5
    $region4: #{tpu_custom_call.1} parent=1 // pred_region
      %s11 = ssub.s32 256, 256
      %12 = vsyncadd [#allocation3], %s11
      %s14 = sshll.u32 [#allocation2], 4
      %s15 = int_to_ptr.vmem [resolvable:$true] %s14
      %17 = dma.hbm_to_vmem [thread:$0]  %s0, 256, %s15, [#allocation3]
    $region5: #{tpu_custom_call.1} parent=1 // pred_fallthru
      _
    // Predicated region
    $region6: #{tpu_custom_call.1} parent=1 // pred_check
      _
    $region7: #{tpu_custom_call.1} parent=1 // pred_check_branch
      %19 = sbr.rel (0) target = $region9
    $region8: #{tpu_custom_call.1} parent=1 // pred_region
      %20 = dma.done [#allocation3], 256
    $region9: #{tpu_custom_call.1} parent=1 // pred_fallthru
      _
    %v21 = vld [vmem:[#allocation2] sm:$0xff]
    %v22 = vld [vmem:[#allocation2 + $0x8] sm:$0xff]
    %v23 = vlog2.pop %v21
    %v24 = vmul.f32 %v23, 0.6931472
    %v25 = vlog2.pop %v22
    %v26 = vmul.f32 %v25, 0.6931472
    %v27 = vsub.f32 0.0, %v24
    %v28 = vsub.f32 0.0, %v26
    %29 = vst [vmem:[#allocation5] sm:$0xff] %v27
    %30 = vst [vmem:[#allocation5 + $0x8] sm:$0xff] %v28
    // Predicated region
    $region10: #{tpu_custom_call.1} parent=1 // pred_check
      _
    $region11: #{tpu_custom_call.1} parent=1 // pred_check_branch
      %32 = sbr.rel (0) target = $region13
    $region12: #{tpu_custom_call.1} parent=1 // pred_region
      %s34 = ssub.s32 256, 256
      %35 = vsyncadd [#allocation4], %s34
      %s37 = sshll.u32 [#allocation5], 4
      %s38 = int_to_ptr.vmem [resolvable:$true] %s37
      %40 = dma.vmem_to_hbm [thread:$0]  %s38, 256, %s1, [#allocation4]
    $region13: #{tpu_custom_call.1} parent=1 // pred_fallthru
      _
    // Predicated region
    $region14: #{tpu_custom_call.1} parent=1 // pred_check
      _
    $region15: #{tpu_custom_call.1} parent=1 // pred_check_branch
      %42 = sbr.rel (0) target = $region17
    $region16: #{tpu_custom_call.1} parent=1 // pred_region
      %43 = dma.done [#allocation4], 256
    $region17: #{tpu_custom_call.1} parent=1 // pred_fallthru
      _
    %44 = vsyncpa [#allocation3], 1
    %45 = vsyncpa [#allocation4], 1

</llo_original>
